<compile_context>
chip_gen: v7x
topology: tpu7x:2x2x1
jax: 0.10.0
libtpu: 0.0.40
codegen_flags: <defaults>
</compile_context>

<pallas_src>
import jax
import jax.numpy as jnp
from jax.experimental import pallas as pl
from jax.experimental.pallas import tpu as pltpu

_VMEM_LIMIT = 32 * 1024 * 1024
_BLOCK_TARGET_BYTES = 1 << 20      # ~1 MiB of f32 tile per input per grid step
_MAX_IMAGES_PER_STEP = 8


def _edge_masks(h, w):
    # Skinny masks; jnp.where broadcasts them against the (h, w) operands.
    row = jax.lax.broadcasted_iota(jnp.int32, (h, 1), 0)
    col = jax.lax.broadcasted_iota(jnp.int32, (1, w), 1)
    return row > 0, row < h - 1, col > 0, col < w - 1


def _l_grad_whole_kernel(a_ref, b_ref, out_ref):
    """Whole-image path. a_ref / b_ref: (TN, H, W) channel-0 slabs."""
    tn, h, w = a_ref.shape
    not_first_row, not_last_row, not_first_col, not_last_col = _edge_masks(h, w)

    # Zero-filled unit shifts via XLU rotate + VPU select.
    # pltpu.roll follows jnp.roll semantics: y[i] = x[(i - shift) mod n].
    def up(x):       # y[i, j] = x[i+1, j]; 0 at i == H-1
        return jnp.where(not_last_row, pltpu.roll(x, h - 1, axis=0), 0.0)

    def down(x):     # y[i, j] = x[i-1, j]; 0 at i == 0
        return jnp.where(not_first_row, pltpu.roll(x, 1, axis=0), 0.0)

    def left(x):     # y[i, j] = x[i, j+1]; 0 at j == W-1
        return jnp.where(not_last_col, pltpu.roll(x, w - 1, axis=1), 0.0)

    def right(x):    # y[i, j] = x[i, j-1]; 0 at j == 0
        return jnp.where(not_first_col, pltpu.roll(x, 1, axis=1), 0.0)

    def sobel(x):
        # Separable Sobel, identical to F.conv2d(x, kx/ky, padding=1).
        d = left(x) - right(x)              # horizontal central difference
        gx = down(d) + 2.0 * d + up(d)      # vertical [1,2,1] smooth
        e = down(x) - up(x)                 # vertical central difference
        gy = right(e) + 2.0 * e + left(e)   # horizontal [1,2,1] smooth
        return jnp.abs(gx) + jnp.abs(gy)

    partial = jnp.zeros((1, w), jnp.float32)
    for i in range(tn):                     # static unroll over TN images
        a = a_ref[i].astype(jnp.float32)
        b = b_ref[i].astype(jnp.float32)
        diff = jnp.abs(sobel(a) - sobel(b))
        partial = partial + jnp.sum(diff, axis=0, keepdims=True)
    out_ref[...] = partial                  # (1, W) column partials


def _l_grad_tiled_kernel(a_ref, a_top_ref, a_bot_ref,
                         b_ref, b_top_ref, b_bot_ref, out_ref):
    """H-tiled path. a_ref/b_ref: (TH, W) tile; *_top/_bot: (8, W) halo blocks
    directly above / below the tile (contents ignored at global top/bottom)."""
    th, w = a_ref.shape
    not_first_row, not_last_row, not_first_col, not_last_col = _edge_masks(th, w)

    h_idx = pl.program_id(1)
    is_first = h_idx == 0
    is_last = h_idx == pl.num_programs(1) - 1

    def left(x):
        return jnp.where(not_last_col, pltpu.roll(x, w - 1, axis=1), 0.0)

    def right(x):
        return jnp.where(not_first_col, pltpu.roll(x, 1, axis=1), 0.0)

    def up(x, below_row):     # y[i] = x[i+1]; last row from halo (or 0 at bottom)
        fill = jnp.where(is_last, jnp.zeros_like(below_row), below_row)
        return jnp.where(not_last_row, pltpu.roll(x, th - 1, axis=0), fill)

    def down(x, above_row):   # y[i] = x[i-1]; first row from halo (or 0 at top)
        fill = jnp.where(is_first, jnp.zeros_like(above_row), above_row)
        return jnp.where(not_first_row, pltpu.roll(x, 1, axis=0), fill)

    def sobel(x, x_above, x_below):
        d = left(x) - right(x)
        d_above = left(x_above) - right(x_above)
        d_below = left(x_below) - right(x_below)
        gx = down(d, d_above) + 2.0 * d + up(d, d_below)
        e = down(x, x_above) - up(x, x_below)
        gy = right(e) + 2.0 * e + left(e)
        return jnp.abs(gx) + jnp.abs(gy)

    a = a_ref[...].astype(jnp.float32)
    b = b_ref[...].astype(jnp.float32)
    a_above = a_top_ref[7:8, :].astype(jnp.float32)   # global row h*TH - 1
    a_below = a_bot_ref[0:1, :].astype(jnp.float32)   # global row (h+1)*TH
    b_above = b_top_ref[7:8, :].astype(jnp.float32)
    b_below = b_bot_ref[0:1, :].astype(jnp.float32)

    diff = jnp.abs(sobel(a, a_above, a_below) - sobel(b, b_above, b_below))
    out_ref[...] = jnp.sum(diff, axis=0, keepdims=True)   # (1, W)


def _largest_divisor(n, cap, multiple_of=1):
    cap = max(min(n, cap), 1)
    for d in range(cap, 0, -1):
        if n % d == 0 and d % multiple_of == 0:
            return d
    return None


def l_grad(image_A, image_B, *, h_tile=None, n_batch=None):
    """Forward of L_Grad. image_A / image_B: (N, C, H, W), NCHW (PyTorch layout).

    Only channel 0 (the "Y" channel) is consumed, exactly like the PyTorch module.
    """
    assert image_A.shape == image_B.shape
    n, _, h, w = image_A.shape
    slab_bytes = h * w * 4            # f32 footprint of one image's Y channel

    # Pick an H tile (multiple of 8, divides H) only when a whole-image slab is
    # too big for the per-step VMEM budget, or when explicitly forced.
    th = None
    if h_tile is not None:
        if h % h_tile == 0 and h_tile % 8 == 0 and h // h_tile >= 2:
            th = h_tile
    elif slab_bytes > _BLOCK_TARGET_BYTES and h % 8 == 0:
        cap_rows = max(_BLOCK_TARGET_BYTES // (w * 4), 8)
        th = _largest_divisor(h, cap_rows, multiple_of=8)
        if th is not None and h // th < 2:
            th = None
    # TODO(synk): H not a multiple of 8 (or with no suitable divisor) falls back
    # to whole-image blocks; add an element-offset halo variant if that matters.

    if th is None:
        # Whole-image blocks; batch TN images per grid step for small images.
        if n_batch is not None and n % n_batch == 0:
            tn = n_batch
        else:
            cap = max(_BLOCK_TARGET_BYTES // max(slab_bytes, 1), 1)
            tn = _largest_divisor(n, min(cap, _MAX_IMAGES_PER_STEP))
        num_steps = n // tn
        in_spec = pl.BlockSpec((tn, None, h, w), lambda s: (s, 0, 0, 0))
        partials = pl.pallas_call(
            _l_grad_whole_kernel,
            out_shape=jax.ShapeDtypeStruct((num_steps, w), jnp.float32),
            grid=(num_steps,),
            in_specs=[in_spec, in_spec],
            out_specs=pl.BlockSpec((1, w), lambda s: (s, 0)),
            compiler_params=pltpu.CompilerParams(
                dimension_semantics=("parallel",),
                vmem_limit_bytes=_VMEM_LIMIT,
            ),
        )(image_A, image_B)
    else:
        nh = h // th
        hb = th // 8                  # 8-row groups per tile
        max_hblk = h // 8 - 1
        main_spec = pl.BlockSpec((None, None, th, w),
                                 lambda i, j: (i, 0, j, 0))
        top_spec = pl.BlockSpec(
            (None, None, 8, w),
            lambda i, j: (i, 0, jnp.maximum(j * hb - 1, 0), 0))
        bot_spec = pl.BlockSpec(
            (None, None, 8, w),
            lambda i, j: (i, 0, jnp.minimum((j + 1) * hb, max_hblk), 0))
        partials = pl.pallas_call(
            _l_grad_tiled_kernel,
            out_shape=jax.ShapeDtypeStruct((n, nh, w), jnp.float32),
            grid=(n, nh),
            in_specs=[main_spec, top_spec, bot_spec,
                      main_spec, top_spec, bot_spec],
            out_specs=pl.BlockSpec((None, 1, w), lambda i, j: (i, j, 0)),
            compiler_params=pltpu.CompilerParams(
                dimension_semantics=("parallel", "parallel"),
                vmem_limit_bytes=_VMEM_LIMIT,
            ),
        )(image_A, image_A, image_A, image_B, image_B, image_B)

    # Final cross-lane / cross-step reduction + mean normalization (denominator
    # is N * 1 * H * W, matching F.l1_loss on the single-channel gradients).
    inv_count = 1.0 / float(n * h * w)
    return jnp.sum(partials) * inv_count


def _l_grad_reference(image_A, image_B):
    """Pure-JAX reference (direct, non-separable form) for validation."""
    def sob(x4):
        x = x4[:, 0, :, :].astype(jnp.float32)
        _, hh, ww = x.shape
        xp = jnp.pad(x, ((0, 0), (1, 1), (1, 1)))

        def sl(di, dj):
            return xp[:, di:di + hh, dj:dj + ww]

        gx = (-sl(0, 0) + sl(0, 2)
              - 2.0 * sl(1, 0) + 2.0 * sl(1, 2)
              - sl(2, 0) + sl(2, 2))
        gy = (sl(0, 0) + 2.0 * sl(0, 1) + sl(0, 2)
              - sl(2, 0) - 2.0 * sl(2, 1) - sl(2, 2))
        return jnp.abs(gx) + jnp.abs(gy)

    return jnp.mean(jnp.abs(sob(image_A) - sob(image_B)))


if __name__ == "__main__":
    key = jax.random.PRNGKey(0)
    ka, kb, kc, kd = jax.random.split(key, 4)

    # 1) Default path: small NCHW inputs -> whole-image blocks, TN images/step.
    image_A = jax.random.uniform(ka, (2, 4, 16, 16), dtype=jnp.float32)
    image_B = jax.random.uniform(kb, (2, 4, 16, 16), dtype=jnp.float32)
    loss = jax.block_until_ready(l_grad(image_A, image_B))
    expected = jax.block_until_ready(_l_grad_reference(image_A, image_B))
    assert loss.shape == ()
    assert jnp.allclose(loss, expected, atol=1e-5, rtol=1e-5), (loss, expected)

    # 2) H-tiled path with 1-row halos (forced small tile to exercise it here).
    big_A = jax.random.uniform(kc, (2, 3, 32, 16), dtype=jnp.float32)
    big_B = jax.random.uniform(kd, (2, 3, 32, 16), dtype=jnp.float32)
    loss_t = jax.block_until_ready(l_grad(big_A, big_B, h_tile=8))
    expected_t = jax.block_until_ready(_l_grad_reference(big_A, big_B))
    assert jnp.allclose(loss_t, expected_t, atol=1e-5, rtol=1e-5), (loss_t, expected_t)

    print("KERNEL_OK")
</pallas_src>

<mosaic_0001>
module attributes {stable_mosaic.version = 11 : i64} {
  func.func @_l_grad_whole_kernel(%arg0: i32, %arg1: memref<2x1x16x16xf32, #tpu.memory_space<vmem>>, %arg2: memref<2x1x16x16xf32, #tpu.memory_space<vmem>>, %arg3: memref<1x16xf32, #tpu.memory_space<vmem>>) attributes {dimension_semantics = [#tpu.dimension_semantics<parallel>], iteration_bounds = array<i64: 1>, scalar_prefetch = 0 : i64, scratch_operands = 0 : i64, tpu.core_type = #tpu.core_type<tc>, window_params = [{transform_indices = @transform_0, window_bounds = array<i64: 2, 1, 16, 16>}, {transform_indices = @transform_1, window_bounds = array<i64: 2, 1, 16, 16>}, {transform_indices = @transform_2, window_bounds = array<i64: 1, 16>}]} {
    %0 = tpu.iota {dimensions = array<i32: 0>} : vector<16x1xi32>
    %1 = tpu.iota {dimensions = array<i32: 1>} : vector<1x16xi32>
    %c0_i32 = arith.constant 0 : i32
    %2 = vector.broadcast %c0_i32 : i32 to vector<16x1xi32>
    %3 = arith.cmpi sgt, %0, %2 : vector<16x1xi32>
    %c15_i32 = arith.constant 15 : i32
    %4 = vector.broadcast %c15_i32 : i32 to vector<16x1xi32>
    %5 = arith.cmpi slt, %0, %4 : vector<16x1xi32>
    %c0_i32_0 = arith.constant 0 : i32
    %6 = vector.broadcast %c0_i32_0 : i32 to vector<1x16xi32>
    %7 = arith.cmpi sgt, %1, %6 : vector<1x16xi32>
    %c15_i32_1 = arith.constant 15 : i32
    %8 = vector.broadcast %c15_i32_1 : i32 to vector<1x16xi32>
    %9 = arith.cmpi slt, %1, %8 : vector<1x16xi32>
    %cst = arith.constant 0.000000e+00 : f32
    %10 = vector.broadcast %cst : f32 to vector<1x16xf32>
    %c0 = arith.constant 0 : index
    %c0_2 = arith.constant 0 : index
    %c0_3 = arith.constant 0 : index
    %c0_4 = arith.constant 0 : index
    %11 = vector.load %arg1[%c0, %c0_2, %c0_3, %c0_4] : memref<2x1x16x16xf32, #tpu.memory_space<vmem>>, vector<1x1x16x16xf32>
    %12 = vector.shape_cast %11 : vector<1x1x16x16xf32> to vector<16x16xf32>
    %c0_5 = arith.constant 0 : index
    %c0_6 = arith.constant 0 : index
    %c0_7 = arith.constant 0 : index
    %c0_8 = arith.constant 0 : index
    %13 = vector.load %arg2[%c0_5, %c0_6, %c0_7, %c0_8] : memref<2x1x16x16xf32, #tpu.memory_space<vmem>>, vector<1x1x16x16xf32>
    %14 = vector.shape_cast %13 : vector<1x1x16x16xf32> to vector<16x16xf32>
    %c15_i32_9 = arith.constant 15 : i32
    %15 = tpu.dynamic_rotate %12 by %c15_i32_9 dim 1 : vector<16x16xf32>, i32 -> vector<16x16xf32>
    %cst_10 = arith.constant 0.000000e+00 : f32
    %16 = vector.shape_cast %9 : vector<1x16xi1> to vector<1x16xi1>
    %17 = vector.broadcast %16 : vector<1x16xi1> to vector<16x16xi1>
    %18 = vector.broadcast %cst_10 : f32 to vector<16x16xf32>
    %19 = arith.select %17, %15, %18 : vector<16x16xi1>, vector<16x16xf32>
    %c1_i32 = arith.constant 1 : i32
    %20 = tpu.dynamic_rotate %12 by %c1_i32 dim 1 : vector<16x16xf32>, i32 -> vector<16x16xf32>
    %cst_11 = arith.constant 0.000000e+00 : f32
    %21 = vector.shape_cast %7 : vector<1x16xi1> to vector<1x16xi1>
    %22 = vector.broadcast %21 : vector<1x16xi1> to vector<16x16xi1>
    %23 = vector.broadcast %cst_11 : f32 to vector<16x16xf32>
    %24 = arith.select %22, %20, %23 : vector<16x16xi1>, vector<16x16xf32>
    %25 = arith.subf %19, %24 : vector<16x16xf32>
    %c1_i32_12 = arith.constant 1 : i32
    %26 = tpu.dynamic_rotate %25 by %c1_i32_12 dim 0 : vector<16x16xf32>, i32 -> vector<16x16xf32>
    %cst_13 = arith.constant 0.000000e+00 : f32
    %27 = vector.shape_cast %3 : vector<16x1xi1> to vector<16x1xi1>
    %28 = vector.broadcast %27 : vector<16x1xi1> to vector<16x16xi1>
    %29 = vector.broadcast %cst_13 : f32 to vector<16x16xf32>
    %30 = arith.select %28, %26, %29 : vector<16x16xi1>, vector<16x16xf32>
    %cst_14 = arith.constant 2.000000e+00 : f32
    %31 = vector.broadcast %cst_14 : f32 to vector<16x16xf32>
    %32 = arith.mulf %31, %25 : vector<16x16xf32>
    %33 = arith.addf %30, %32 : vector<16x16xf32>
    %c15_i32_15 = arith.constant 15 : i32
    %34 = tpu.dynamic_rotate %25 by %c15_i32_15 dim 0 : vector<16x16xf32>, i32 -> vector<16x16xf32>
    %cst_16 = arith.constant 0.000000e+00 : f32
    %35 = vector.shape_cast %5 : vector<16x1xi1> to vector<16x1xi1>
    %36 = vector.broadcast %35 : vector<16x1xi1> to vector<16x16xi1>
    %37 = vector.broadcast %cst_16 : f32 to vector<16x16xf32>
    %38 = arith.select %36, %34, %37 : vector<16x16xi1>, vector<16x16xf32>
    %39 = arith.addf %33, %38 : vector<16x16xf32>
    %c1_i32_17 = arith.constant 1 : i32
    %40 = tpu.dynamic_rotate %12 by %c1_i32_17 dim 0 : vector<16x16xf32>, i32 -> vector<16x16xf32>
    %cst_18 = arith.constant 0.000000e+00 : f32
    %41 = vector.shape_cast %3 : vector<16x1xi1> to vector<16x1xi1>
    %42 = vector.broadcast %41 : vector<16x1xi1> to vector<16x16xi1>
    %43 = vector.broadcast %cst_18 : f32 to vector<16x16xf32>
    %44 = arith.select %42, %40, %43 : vector<16x16xi1>, vector<16x16xf32>
    %c15_i32_19 = arith.constant 15 : i32
    %45 = tpu.dynamic_rotate %12 by %c15_i32_19 dim 0 : vector<16x16xf32>, i32 -> vector<16x16xf32>
    %cst_20 = arith.constant 0.000000e+00 : f32
    %46 = vector.shape_cast %5 : vector<16x1xi1> to vector<16x1xi1>
    %47 = vector.broadcast %46 : vector<16x1xi1> to vector<16x16xi1>
    %48 = vector.broadcast %cst_20 : f32 to vector<16x16xf32>
    %49 = arith.select %47, %45, %48 : vector<16x16xi1>, vector<16x16xf32>
    %50 = arith.subf %44, %49 : vector<16x16xf32>
    %c1_i32_21 = arith.constant 1 : i32
    %51 = tpu.dynamic_rotate %50 by %c1_i32_21 dim 1 : vector<16x16xf32>, i32 -> vector<16x16xf32>
    %cst_22 = arith.constant 0.000000e+00 : f32
    %52 = vector.shape_cast %7 : vector<1x16xi1> to vector<1x16xi1>
    %53 = vector.broadcast %52 : vector<1x16xi1> to vector<16x16xi1>
    %54 = vector.broadcast %cst_22 : f32 to vector<16x16xf32>
    %55 = arith.select %53, %51, %54 : vector<16x16xi1>, vector<16x16xf32>
    %cst_23 = arith.constant 2.000000e+00 : f32
    %56 = vector.broadcast %cst_23 : f32 to vector<16x16xf32>
    %57 = arith.mulf %56, %50 : vector<16x16xf32>
    %58 = arith.addf %55, %57 : vector<16x16xf32>
    %c15_i32_24 = arith.constant 15 : i32
    %59 = tpu.dynamic_rotate %50 by %c15_i32_24 dim 1 : vector<16x16xf32>, i32 -> vector<16x16xf32>
    %cst_25 = arith.constant 0.000000e+00 : f32
    %60 = vector.shape_cast %9 : vector<1x16xi1> to vector<1x16xi1>
    %61 = vector.broadcast %60 : vector<1x16xi1> to vector<16x16xi1>
    %62 = vector.broadcast %cst_25 : f32 to vector<16x16xf32>
    %63 = arith.select %61, %59, %62 : vector<16x16xi1>, vector<16x16xf32>
    %64 = arith.addf %58, %63 : vector<16x16xf32>
    %65 = math.absf %39 : vector<16x16xf32>
    %66 = math.absf %64 : vector<16x16xf32>
    %67 = arith.addf %65, %66 : vector<16x16xf32>
    %c15_i32_26 = arith.constant 15 : i32
    %68 = tpu.dynamic_rotate %14 by %c15_i32_26 dim 1 : vector<16x16xf32>, i32 -> vector<16x16xf32>
    %cst_27 = arith.constant 0.000000e+00 : f32
    %69 = vector.shape_cast %9 : vector<1x16xi1> to vector<1x16xi1>
    %70 = vector.broadcast %69 : vector<1x16xi1> to vector<16x16xi1>
    %71 = vector.broadcast %cst_27 : f32 to vector<16x16xf32>
    %72 = arith.select %70, %68, %71 : vector<16x16xi1>, vector<16x16xf32>
    %c1_i32_28 = arith.constant 1 : i32
    %73 = tpu.dynamic_rotate %14 by %c1_i32_28 dim 1 : vector<16x16xf32>, i32 -> vector<16x16xf32>
    %cst_29 = arith.constant 0.000000e+00 : f32
    %74 = vector.shape_cast %7 : vector<1x16xi1> to vector<1x16xi1>
    %75 = vector.broadcast %74 : vector<1x16xi1> to vector<16x16xi1>
    %76 = vector.broadcast %cst_29 : f32 to vector<16x16xf32>
    %77 = arith.select %75, %73, %76 : vector<16x16xi1>, vector<16x16xf32>
    %78 = arith.subf %72, %77 : vector<16x16xf32>
    %c1_i32_30 = arith.constant 1 : i32
    %79 = tpu.dynamic_rotate %78 by %c1_i32_30 dim 0 : vector<16x16xf32>, i32 -> vector<16x16xf32>
    %cst_31 = arith.constant 0.000000e+00 : f32
    %80 = vector.shape_cast %3 : vector<16x1xi1> to vector<16x1xi1>
    %81 = vector.broadcast %80 : vector<16x1xi1> to vector<16x16xi1>
    %82 = vector.broadcast %cst_31 : f32 to vector<16x16xf32>
    %83 = arith.select %81, %79, %82 : vector<16x16xi1>, vector<16x16xf32>
    %cst_32 = arith.constant 2.000000e+00 : f32
    %84 = vector.broadcast %cst_32 : f32 to vector<16x16xf32>
    %85 = arith.mulf %84, %78 : vector<16x16xf32>
    %86 = arith.addf %83, %85 : vector<16x16xf32>
    %c15_i32_33 = arith.constant 15 : i32
    %87 = tpu.dynamic_rotate %78 by %c15_i32_33 dim 0 : vector<16x16xf32>, i32 -> vector<16x16xf32>
    %cst_34 = arith.constant 0.000000e+00 : f32
    %88 = vector.shape_cast %5 : vector<16x1xi1> to vector<16x1xi1>
    %89 = vector.broadcast %88 : vector<16x1xi1> to vector<16x16xi1>
    %90 = vector.broadcast %cst_34 : f32 to vector<16x16xf32>
    %91 = arith.select %89, %87, %90 : vector<16x16xi1>, vector<16x16xf32>
    %92 = arith.addf %86, %91 : vector<16x16xf32>
    %c1_i32_35 = arith.constant 1 : i32
    %93 = tpu.dynamic_rotate %14 by %c1_i32_35 dim 0 : vector<16x16xf32>, i32 -> vector<16x16xf32>
    %cst_36 = arith.constant 0.000000e+00 : f32
    %94 = vector.shape_cast %3 : vector<16x1xi1> to vector<16x1xi1>
    %95 = vector.broadcast %94 : vector<16x1xi1> to vector<16x16xi1>
    %96 = vector.broadcast %cst_36 : f32 to vector<16x16xf32>
    %97 = arith.select %95, %93, %96 : vector<16x16xi1>, vector<16x16xf32>
    %c15_i32_37 = arith.constant 15 : i32
    %98 = tpu.dynamic_rotate %14 by %c15_i32_37 dim 0 : vector<16x16xf32>, i32 -> vector<16x16xf32>
    %cst_38 = arith.constant 0.000000e+00 : f32
    %99 = vector.shape_cast %5 : vector<16x1xi1> to vector<16x1xi1>
    %100 = vector.broadcast %99 : vector<16x1xi1> to vector<16x16xi1>
    %101 = vector.broadcast %cst_38 : f32 to vector<16x16xf32>
    %102 = arith.select %100, %98, %101 : vector<16x16xi1>, vector<16x16xf32>
    %103 = arith.subf %97, %102 : vector<16x16xf32>
    %c1_i32_39 = arith.constant 1 : i32
    %104 = tpu.dynamic_rotate %103 by %c1_i32_39 dim 1 : vector<16x16xf32>, i32 -> vector<16x16xf32>
    %cst_40 = arith.constant 0.000000e+00 : f32
    %105 = vector.shape_cast %7 : vector<1x16xi1> to vector<1x16xi1>
    %106 = vector.broadcast %105 : vector<1x16xi1> to vector<16x16xi1>
    %107 = vector.broadcast %cst_40 : f32 to vector<16x16xf32>
    %108 = arith.select %106, %104, %107 : vector<16x16xi1>, vector<16x16xf32>
    %cst_41 = arith.constant 2.000000e+00 : f32
    %109 = vector.broadcast %cst_41 : f32 to vector<16x16xf32>
    %110 = arith.mulf %109, %103 : vector<16x16xf32>
    %111 = arith.addf %108, %110 : vector<16x16xf32>
    %c15_i32_42 = arith.constant 15 : i32
    %112 = tpu.dynamic_rotate %103 by %c15_i32_42 dim 1 : vector<16x16xf32>, i32 -> vector<16x16xf32>
    %cst_43 = arith.constant 0.000000e+00 : f32
    %113 = vector.shape_cast %9 : vector<1x16xi1> to vector<1x16xi1>
    %114 = vector.broadcast %113 : vector<1x16xi1> to vector<16x16xi1>
    %115 = vector.broadcast %cst_43 : f32 to vector<16x16xf32>
    %116 = arith.select %114, %112, %115 : vector<16x16xi1>, vector<16x16xf32>
    %117 = arith.addf %111, %116 : vector<16x16xf32>
    %118 = math.absf %92 : vector<16x16xf32>
    %119 = math.absf %117 : vector<16x16xf32>
    %120 = arith.addf %118, %119 : vector<16x16xf32>
    %121 = arith.subf %67, %120 : vector<16x16xf32>
    %122 = math.absf %121 : vector<16x16xf32>
    %cst_44 = arith.constant dense<0.000000e+00> : vector<16xf32>
    %123 = vector.multi_reduction <add>, %122, %cst_44 [0] : vector<16x16xf32> to vector<16xf32>
    %124 = vector.shape_cast %123 : vector<16xf32> to vector<1x16xf32>
    %125 = arith.addf %10, %124 : vector<1x16xf32>
    %c1 = arith.constant 1 : index
    %c0_45 = arith.constant 0 : index
    %c0_46 = arith.constant 0 : index
    %c0_47 = arith.constant 0 : index
    %126 = vector.load %arg1[%c1, %c0_45, %c0_46, %c0_47] : memref<2x1x16x16xf32, #tpu.memory_space<vmem>>, vector<1x1x16x16xf32>
    %127 = vector.shape_cast %126 : vector<1x1x16x16xf32> to vector<16x16xf32>
    %c1_48 = arith.constant 1 : index
    %c0_49 = arith.constant 0 : index
    %c0_50 = arith.constant 0 : index
    %c0_51 = arith.constant 0 : index
    %128 = vector.load %arg2[%c1_48, %c0_49, %c0_50, %c0_51] : memref<2x1x16x16xf32, #tpu.memory_space<vmem>>, vector<1x1x16x16xf32>
    %129 = vector.shape_cast %128 : vector<1x1x16x16xf32> to vector<16x16xf32>
    %c15_i32_52 = arith.constant 15 : i32
    %130 = tpu.dynamic_rotate %127 by %c15_i32_52 dim 1 : vector<16x16xf32>, i32 -> vector<16x16xf32>
    %cst_53 = arith.constant 0.000000e+00 : f32
    %131 = vector.shape_cast %9 : vector<1x16xi1> to vector<1x16xi1>
    %132 = vector.broadcast %131 : vector<1x16xi1> to vector<16x16xi1>
    %133 = vector.broadcast %cst_53 : f32 to vector<16x16xf32>
    %134 = arith.select %132, %130, %133 : vector<16x16xi1>, vector<16x16xf32>
    %c1_i32_54 = arith.constant 1 : i32
    %135 = tpu.dynamic_rotate %127 by %c1_i32_54 dim 1 : vector<16x16xf32>, i32 -> vector<16x16xf32>
    %cst_55 = arith.constant 0.000000e+00 : f32
    %136 = vector.shape_cast %7 : vector<1x16xi1> to vector<1x16xi1>
    %137 = vector.broadcast %136 : vector<1x16xi1> to vector<16x16xi1>
    %138 = vector.broadcast %cst_55 : f32 to vector<16x16xf32>
    %139 = arith.select %137, %135, %138 : vector<16x16xi1>, vector<16x16xf32>
    %140 = arith.subf %134, %139 : vector<16x16xf32>
    %c1_i32_56 = arith.constant 1 : i32
    %141 = tpu.dynamic_rotate %140 by %c1_i32_56 dim 0 : vector<16x16xf32>, i32 -> vector<16x16xf32>
    %cst_57 = arith.constant 0.000000e+00 : f32
    %142 = vector.shape_cast %3 : vector<16x1xi1> to vector<16x1xi1>
    %143 = vector.broadcast %142 : vector<16x1xi1> to vector<16x16xi1>
    %144 = vector.broadcast %cst_57 : f32 to vector<16x16xf32>
    %145 = arith.select %143, %141, %144 : vector<16x16xi1>, vector<16x16xf32>
    %cst_58 = arith.constant 2.000000e+00 : f32
    %146 = vector.broadcast %cst_58 : f32 to vector<16x16xf32>
    %147 = arith.mulf %146, %140 : vector<16x16xf32>
    %148 = arith.addf %145, %147 : vector<16x16xf32>
    %c15_i32_59 = arith.constant 15 : i32
    %149 = tpu.dynamic_rotate %140 by %c15_i32_59 dim 0 : vector<16x16xf32>, i32 -> vector<16x16xf32>
    %cst_60 = arith.constant 0.000000e+00 : f32
    %150 = vector.shape_cast %5 : vector<16x1xi1> to vector<16x1xi1>
    %151 = vector.broadcast %150 : vector<16x1xi1> to vector<16x16xi1>
    %152 = vector.broadcast %cst_60 : f32 to vector<16x16xf32>
    %153 = arith.select %151, %149, %152 : vector<16x16xi1>, vector<16x16xf32>
    %154 = arith.addf %148, %153 : vector<16x16xf32>
    %c1_i32_61 = arith.constant 1 : i32
    %155 = tpu.dynamic_rotate %127 by %c1_i32_61 dim 0 : vector<16x16xf32>, i32 -> vector<16x16xf32>
    %cst_62 = arith.constant 0.000000e+00 : f32
    %156 = vector.shape_cast %3 : vector<16x1xi1> to vector<16x1xi1>
    %157 = vector.broadcast %156 : vector<16x1xi1> to vector<16x16xi1>
    %158 = vector.broadcast %cst_62 : f32 to vector<16x16xf32>
    %159 = arith.select %157, %155, %158 : vector<16x16xi1>, vector<16x16xf32>
    %c15_i32_63 = arith.constant 15 : i32
    %160 = tpu.dynamic_rotate %127 by %c15_i32_63 dim 0 : vector<16x16xf32>, i32 -> vector<16x16xf32>
    %cst_64 = arith.constant 0.000000e+00 : f32
    %161 = vector.shape_cast %5 : vector<16x1xi1> to vector<16x1xi1>
    %162 = vector.broadcast %161 : vector<16x1xi1> to vector<16x16xi1>
    %163 = vector.broadcast %cst_64 : f32 to vector<16x16xf32>
    %164 = arith.select %162, %160, %163 : vector<16x16xi1>, vector<16x16xf32>
    %165 = arith.subf %159, %164 : vector<16x16xf32>
    %c1_i32_65 = arith.constant 1 : i32
    %166 = tpu.dynamic_rotate %165 by %c1_i32_65 dim 1 : vector<16x16xf32>, i32 -> vector<16x16xf32>
    %cst_66 = arith.constant 0.000000e+00 : f32
    %167 = vector.shape_cast %7 : vector<1x16xi1> to vector<1x16xi1>
    %168 = vector.broadcast %167 : vector<1x16xi1> to vector<16x16xi1>
    %169 = vector.broadcast %cst_66 : f32 to vector<16x16xf32>
    %170 = arith.select %168, %166, %169 : vector<16x16xi1>, vector<16x16xf32>
    %cst_67 = arith.constant 2.000000e+00 : f32
    %171 = vector.broadcast %cst_67 : f32 to vector<16x16xf32>
    %172 = arith.mulf %171, %165 : vector<16x16xf32>
    %173 = arith.addf %170, %172 : vector<16x16xf32>
    %c15_i32_68 = arith.constant 15 : i32
    %174 = tpu.dynamic_rotate %165 by %c15_i32_68 dim 1 : vector<16x16xf32>, i32 -> vector<16x16xf32>
    %cst_69 = arith.constant 0.000000e+00 : f32
    %175 = vector.shape_cast %9 : vector<1x16xi1> to vector<1x16xi1>
    %176 = vector.broadcast %175 : vector<1x16xi1> to vector<16x16xi1>
    %177 = vector.broadcast %cst_69 : f32 to vector<16x16xf32>
    %178 = arith.select %176, %174, %177 : vector<16x16xi1>, vector<16x16xf32>
    %179 = arith.addf %173, %178 : vector<16x16xf32>
    %180 = math.absf %154 : vector<16x16xf32>
    %181 = math.absf %179 : vector<16x16xf32>
    %182 = arith.addf %180, %181 : vector<16x16xf32>
    %c15_i32_70 = arith.constant 15 : i32
    %183 = tpu.dynamic_rotate %129 by %c15_i32_70 dim 1 : vector<16x16xf32>, i32 -> vector<16x16xf32>
    %cst_71 = arith.constant 0.000000e+00 : f32
    %184 = vector.shape_cast %9 : vector<1x16xi1> to vector<1x16xi1>
    %185 = vector.broadcast %184 : vector<1x16xi1> to vector<16x16xi1>
    %186 = vector.broadcast %cst_71 : f32 to vector<16x16xf32>
    %187 = arith.select %185, %183, %186 : vector<16x16xi1>, vector<16x16xf32>
    %c1_i32_72 = arith.constant 1 : i32
    %188 = tpu.dynamic_rotate %129 by %c1_i32_72 dim 1 : vector<16x16xf32>, i32 -> vector<16x16xf32>
    %cst_73 = arith.constant 0.000000e+00 : f32
    %189 = vector.shape_cast %7 : vector<1x16xi1> to vector<1x16xi1>
    %190 = vector.broadcast %189 : vector<1x16xi1> to vector<16x16xi1>
    %191 = vector.broadcast %cst_73 : f32 to vector<16x16xf32>
    %192 = arith.select %190, %188, %191 : vector<16x16xi1>, vector<16x16xf32>
    %193 = arith.subf %187, %192 : vector<16x16xf32>
    %c1_i32_74 = arith.constant 1 : i32
    %194 = tpu.dynamic_rotate %193 by %c1_i32_74 dim 0 : vector<16x16xf32>, i32 -> vector<16x16xf32>
    %cst_75 = arith.constant 0.000000e+00 : f32
    %195 = vector.shape_cast %3 : vector<16x1xi1> to vector<16x1xi1>
    %196 = vector.broadcast %195 : vector<16x1xi1> to vector<16x16xi1>
    %197 = vector.broadcast %cst_75 : f32 to vector<16x16xf32>
    %198 = arith.select %196, %194, %197 : vector<16x16xi1>, vector<16x16xf32>
    %cst_76 = arith.constant 2.000000e+00 : f32
    %199 = vector.broadcast %cst_76 : f32 to vector<16x16xf32>
    %200 = arith.mulf %199, %193 : vector<16x16xf32>
    %201 = arith.addf %198, %200 : vector<16x16xf32>
    %c15_i32_77 = arith.constant 15 : i32
    %202 = tpu.dynamic_rotate %193 by %c15_i32_77 dim 0 : vector<16x16xf32>, i32 -> vector<16x16xf32>
    %cst_78 = arith.constant 0.000000e+00 : f32
    %203 = vector.shape_cast %5 : vector<16x1xi1> to vector<16x1xi1>
    %204 = vector.broadcast %203 : vector<16x1xi1> to vector<16x16xi1>
    %205 = vector.broadcast %cst_78 : f32 to vector<16x16xf32>
    %206 = arith.select %204, %202, %205 : vector<16x16xi1>, vector<16x16xf32>
    %207 = arith.addf %201, %206 : vector<16x16xf32>
    %c1_i32_79 = arith.constant 1 : i32
    %208 = tpu.dynamic_rotate %129 by %c1_i32_79 dim 0 : vector<16x16xf32>, i32 -> vector<16x16xf32>
    %cst_80 = arith.constant 0.000000e+00 : f32
    %209 = vector.shape_cast %3 : vector<16x1xi1> to vector<16x1xi1>
    %210 = vector.broadcast %209 : vector<16x1xi1> to vector<16x16xi1>
    %211 = vector.broadcast %cst_80 : f32 to vector<16x16xf32>
    %212 = arith.select %210, %208, %211 : vector<16x16xi1>, vector<16x16xf32>
    %c15_i32_81 = arith.constant 15 : i32
    %213 = tpu.dynamic_rotate %129 by %c15_i32_81 dim 0 : vector<16x16xf32>, i32 -> vector<16x16xf32>
    %cst_82 = arith.constant 0.000000e+00 : f32
    %214 = vector.shape_cast %5 : vector<16x1xi1> to vector<16x1xi1>
    %215 = vector.broadcast %214 : vector<16x1xi1> to vector<16x16xi1>
    %216 = vector.broadcast %cst_82 : f32 to vector<16x16xf32>
    %217 = arith.select %215, %213, %216 : vector<16x16xi1>, vector<16x16xf32>
    %218 = arith.subf %212, %217 : vector<16x16xf32>
    %c1_i32_83 = arith.constant 1 : i32
    %219 = tpu.dynamic_rotate %218 by %c1_i32_83 dim 1 : vector<16x16xf32>, i32 -> vector<16x16xf32>
    %cst_84 = arith.constant 0.000000e+00 : f32
    %220 = vector.shape_cast %7 : vector<1x16xi1> to vector<1x16xi1>
    %221 = vector.broadcast %220 : vector<1x16xi1> to vector<16x16xi1>
    %222 = vector.broadcast %cst_84 : f32 to vector<16x16xf32>
    %223 = arith.select %221, %219, %222 : vector<16x16xi1>, vector<16x16xf32>
    %cst_85 = arith.constant 2.000000e+00 : f32
    %224 = vector.broadcast %cst_85 : f32 to vector<16x16xf32>
    %225 = arith.mulf %224, %218 : vector<16x16xf32>
    %226 = arith.addf %223, %225 : vector<16x16xf32>
    %c15_i32_86 = arith.constant 15 : i32
    %227 = tpu.dynamic_rotate %218 by %c15_i32_86 dim 1 : vector<16x16xf32>, i32 -> vector<16x16xf32>
    %cst_87 = arith.constant 0.000000e+00 : f32
    %228 = vector.shape_cast %9 : vector<1x16xi1> to vector<1x16xi1>
    %229 = vector.broadcast %228 : vector<1x16xi1> to vector<16x16xi1>
    %230 = vector.broadcast %cst_87 : f32 to vector<16x16xf32>
    %231 = arith.select %229, %227, %230 : vector<16x16xi1>, vector<16x16xf32>
    %232 = arith.addf %226, %231 : vector<16x16xf32>
    %233 = math.absf %207 : vector<16x16xf32>
    %234 = math.absf %232 : vector<16x16xf32>
    %235 = arith.addf %233, %234 : vector<16x16xf32>
    %236 = arith.subf %182, %235 : vector<16x16xf32>
    %237 = math.absf %236 : vector<16x16xf32>
    %cst_88 = arith.constant dense<0.000000e+00> : vector<16xf32>
    %238 = vector.multi_reduction <add>, %237, %cst_88 [0] : vector<16x16xf32> to vector<16xf32>
    %239 = vector.shape_cast %238 : vector<16xf32> to vector<1x16xf32>
    %240 = arith.addf %125, %239 : vector<1x16xf32>
    %c0_89 = arith.constant 0 : index
    %c0_90 = arith.constant 0 : index
    %241 = vector.load %arg3[%c0_89, %c0_90] : memref<1x16xf32, #tpu.memory_space<vmem>>, vector<1x16xf32>
    tpu.vector_store %arg3[%c0_89, %c0_90], %240 {strides = array<i32>} : memref<1x16xf32, #tpu.memory_space<vmem>>, vector<1x16xf32>,
    return
  }
  func.func @transform_0(%arg0: i32) -> (i32, i32, i32, i32) {
    %c0_i32 = arith.constant 0 : i32
    %c0_i32_0 = arith.constant 0 : i32
    %c0_i32_1 = arith.constant 0 : i32
    %c0_i32_2 = arith.constant 0 : i32
    return %arg0, %c0_i32, %c0_i32_0, %c0_i32_1 : i32, i32, i32, i32
  }
  func.func @transform_1(%arg0: i32) -> (i32, i32, i32, i32) {
    %c0_i32 = arith.constant 0 : i32
    %c0_i32_0 = arith.constant 0 : i32
    %c0_i32_1 = arith.constant 0 : i32
    %c0_i32_2 = arith.constant 0 : i32
    return %arg0, %c0_i32, %c0_i32_0, %c0_i32_1 : i32, i32, i32, i32
  }
  func.func @transform_2(%arg0: i32) -> (i32, i32) {
    %c0_i32 = arith.constant 0 : i32
    %c0_i32_0 = arith.constant 0 : i32
    return %arg0, %c0_i32 : i32, i32
  }
}

</mosaic_0001>

<llo_original>
// kernel: tpu_custom_call.1
$region0: #{tpu_custom_call.1}
  #allocation0 [shape = 'u32[]', space=smem, size = 0x4, offset = 0x4, fixed_abs, tag = 'smem constant byte address 0x4 - core index']
  #allocation1 [shape = 'u32[144,128]{1,0:T(1,128)}', space=vmem, size = 0x12000, scoped, tag = 'internal scratch']
  #allocation8 [shape = 's32[]', space=sflag, size = 0x4, offset = 0, fixed_abs, tag = 'sflag constant byte address 0x0 - dummy sync flag']
  #allocation10 [shape = 's32[]', space=sflag, size = 0x4, offset = 0, fixed_abs, tag = 'sflag constant byte address 0x0 - dummy sync flag']
  %s0 = inlined_call_operand.hbm [shape: f32[2,4,16,16], index: 0, kind: input, shape index: {}]
  %s1 = inlined_call_operand.hbm [shape: f32[2,4,16,16], index: 1, kind: input, shape index: {}]
  %s2 = inlined_call_operand.hbm [shape: f32[1,16], index: 2, kind: output, shape index: {}]
  %s3 = sld [smem:[#allocation0]]
  $region26: #{tpu_custom_call.1} parent=0
    _
  %s5 = ssub.s32 1, %s3
  %s6 = scalar_select 0, %s5, %s3
  $region1: #{tpu_custom_call.1} parent=0
    #allocation2 [shape = 'u8[16384]{0}', space=vmem, size = 0x4000, scoped, tag = 'input window, operand 0, single buffered']
    #allocation3 [shape = 's32[1]{0}', space=sflag, size = 0x4, scoped, tag = 'scoped memory for tpu_custom_call.1']
    #allocation4 [shape = 's32[1]{0}', space=sflag, size = 0x4, scoped, tag = 'scoped memory for tpu_custom_call.1']
    #allocation5 [shape = 'u8[16384]{0}', space=vmem, size = 0x4000, scoped, tag = 'input window, operand 1, single buffered']
    #allocation6 [shape = 's32[1]{0}', space=sflag, size = 0x4, scoped, tag = 'scoped memory for tpu_custom_call.1']
    #allocation7 [shape = 'u8[512]{0}', space=vmem, size = 0x400, scoped, tag = 'output window, operand 0, single buffered']
    %7 = vsyncpa [#allocation3], 0
    %8 = vsyncpa [#allocation6], 0
    %9 = vsyncpa [#allocation4], 0
    // Predicated region
    $region2: #{tpu_custom_call.1} parent=1 // pred_check
      _
    $region3: #{tpu_custom_call.1} parent=1 // pred_check_branch
      %11 = sbr.rel (0) target = $region5
    $region4: #{tpu_custom_call.1} parent=1 // pred_region
      #allocation9 [shape = 'u32[6]{0}', space=smem, size = 0x18, scoped, tag = 'DMA stride descriptor']
      %s13 = ssub.s32 512, 512
      %14 = vsyncadd [#allocation3], %s13
      %s16 = sshll.u32 1, 14
      %s17 = sxor.u32 4294967295, %s16
      %s19 = sld [smem:[#allocation0]]
      %s20 = sadd.s32 2, %s19
      %s22 = sshll.u32 7, 26
      %s23 = sxor.u32 4294967295, %s22
      %s24 = sand.u32 0, %s23
      %s25 = sshll.u32 %s20, 26
      %s26 = sor.u32 %s24, %s25
      %s27 = sshll.u32 [#allocation2], 4
      %s28 = int_to_ptr.vmem [resolvable:$true] %s27
      %34 = sst [smem:[#allocation9]] 1024
      %s35 = scalar_lea.smem [#allocation9], 1
      %36 = sst [smem:[%s35]] 256
      %s37 = scalar_lea.smem [#allocation9], 2
      %38 = sst [smem:[%s37]] 2
      %s39 = scalar_lea.smem [#allocation9], 3
      %40 = sst [smem:[%s39]] 128
      %s41 = scalar_lea.smem [#allocation9], 4
      %42 = sst [smem:[%s41]] 128
      %s43 = scalar_lea.smem [#allocation9], 5
      %44 = sst [smem:[%s43]] 8
      %46 = dma.general %s0, 512, %s28, [#allocation3], [#allocation8], [#allocation9], %s26, 0
    $region5: #{tpu_custom_call.1} parent=1 // pred_fallthru
      _
    // Predicated region
    $region6: #{tpu_custom_call.1} parent=1 // pred_check
      _
    $region7: #{tpu_custom_call.1} parent=1 // pred_check_branch
      %48 = sbr.rel (0) target = $region9
    $region8: #{tpu_custom_call.1} parent=1 // pred_region
      #allocation11 [shape = 'u32[6]{0}', space=smem, size = 0x18, scoped, tag = 'DMA stride descriptor']
      %s50 = ssub.s32 512, 512
      %51 = vsyncadd [#allocation6], %s50
      %s53 = sshll.u32 1, 14
      %s54 = sxor.u32 4294967295, %s53
      %s56 = sld [smem:[#allocation0]]
      %s57 = sadd.s32 2, %s56
      %s59 = sshll.u32 7, 26
      %s60 = sxor.u32 4294967295, %s59
      %s61 = sand.u32 0, %s60
      %s62 = sshll.u32 %s57, 26
      %s63 = sor.u32 %s61, %s62
      %s64 = sshll.u32 [#allocation5], 4
      %s65 = int_to_ptr.vmem [resolvable:$true] %s64
      %71 = sst [smem:[#allocation11]] 1024
      %s72 = scalar_lea.smem [#allocation11], 1
      %73 = sst [smem:[%s72]] 256
      %s74 = scalar_lea.smem [#allocation11], 2
      %75 = sst [smem:[%s74]] 2
      %s76 = scalar_lea.smem [#allocation11], 3
      %77 = sst [smem:[%s76]] 128
      %s78 = scalar_lea.smem [#allocation11], 4
      %79 = sst [smem:[%s78]] 128
      %s80 = scalar_lea.smem [#allocation11], 5
      %81 = sst [smem:[%s80]] 8
      %83 = dma.general %s1, 512, %s65, [#allocation6], [#allocation10], [#allocation11], %s63, 0
    $region9: #{tpu_custom_call.1} parent=1 // pred_fallthru
      _
    // Predicated region
    $region10: #{tpu_custom_call.1} parent=1 // pred_check
      _
    $region11: #{tpu_custom_call.1} parent=1 // pred_check_branch
      %85 = sbr.rel (0) target = $region13
    $region12: #{tpu_custom_call.1} parent=1 // pred_region
      %86 = dma.done [#allocation3], 512
    $region13: #{tpu_custom_call.1} parent=1 // pred_fallthru
      _
    // Predicated region
    $region14: #{tpu_custom_call.1} parent=1 // pred_check
      _
    $region15: #{tpu_custom_call.1} parent=1 // pred_check_branch
      %88 = sbr.rel (0) target = $region17
    $region16: #{tpu_custom_call.1} parent=1 // pred_region
      %89 = dma.done [#allocation6], 512
    $region17: #{tpu_custom_call.1} parent=1 // pred_fallthru
      _
    %v90 = vlaneseq
    %v91 = vshrl.u32 %v90, 7
    %v92 = vadd.s32 %v91, 8
    %v93 = vlaneseq
    %v94 = vand.u32 %v93, 127
    %vm95 = vcmp.gt.s32.totalorder %v91, 0
    %vm96 = vcmp.gt.s32.totalorder %v92, 0
    %vm97 = vcmp.lt.s32.totalorder %v91, 15
    %vm98 = vcmp.lt.s32.totalorder %v92, 15
    %vm99 = vcmp.gt.s32.totalorder %v94, 0
    %vm100 = vcmp.lt.s32.totalorder %v94, 15
    %v101 = vld [vmem:[#allocation2] sm:$0xff]
    %v102 = vld [vmem:[#allocation2 + $0x8] sm:$0xff]
    %v103 = vld [vmem:[#allocation5] sm:$0xff]
    %v104 = vld [vmem:[#allocation5 + $0x8] sm:$0xff]
    %vm105 = vcmask 1047680
    %106 = vrot.lane.b32.xlu0 %v101, 16
    %v107 = vpop.permute.xlu0 %106
    %v108 = vsel %vm105, %v107, %v101
    %109 = vrot.lane.b32.xlu0 %v102, 16
    %v110 = vpop.permute.xlu0 %109
    %v111 = vsel %vm105, %v110, %v102
    %112 = vrot.lane.b32.xlu0 %v108, 16
    %v113 = vpop.permute.xlu0 %112
    %114 = vrot.lane.b32.xlu0 %v111, 16
    %v115 = vpop.permute.xlu0 %114
    %v116 = vsel %vm105, %v113, %v101
    %v117 = vsel %vm105, %v115, %v102
    %v118 = vsel %vm100, 1, 0
    %vm119 = vcmp.eq.s32.totalorder %v118, 1
    %122 = vrot.lane.b32.xlu0 %v116, 127
    %v123 = vpop.permute.xlu0 %122
    %124 = vrot.lane.b32.xlu0 %v117, 127
    %v125 = vpop.permute.xlu0 %124
    %v128 = vsel %vm119, %v123, 0.0
    %v129 = vsel %vm119, %v125, 0.0
    %v130 = vsel %vm99, 1, 0
    %vm131 = vcmp.eq.s32.totalorder %v130, 1
    %132 = vrot.lane.b32.xlu0 %v116, 113
    %v133 = vpop.permute.xlu0 %132
    %134 = vrot.lane.b32.xlu0 %v117, 113
    %v135 = vpop.permute.xlu0 %134
    %v138 = vsel %vm131, %v133, 0.0
    %v139 = vsel %vm131, %v135, 0.0
    %v140 = vsub.f32 %v128, %v138
    %v141 = vsub.f32 %v129, %v139
    %v142 = vrot.slane %v140, 7
    %v143 = vrot.slane %v141, 7
    %vm144 = vcmp.lt.s32.totalorder %v91, 1
    %v145 = vsel %vm144, %v142, %v143
    %v146 = vsel %vm144, %v143, %v142
    %v147 = vsel %vm95, 1, 0
    %v148 = vsel %vm96, 1, 0
    %vm149 = vcmp.eq.s32.totalorder %v147, 1
    %vm150 = vcmp.eq.s32.totalorder %v148, 1
    %v151 = vsel %vm149, %v146, 0.0
    %v152 = vsel %vm150, %v145, 0.0
    %v153 = vmul.f32 %v140, 2.0
    %v154 = vmul.f32 %v141, 2.0
    %v155 = vadd.f32 %v151, %v153
    %v156 = vadd.f32 %v152, %v154
    %v157 = vrot.slane %v140, 1
    %v158 = vrot.slane %v141, 1
    %vm159 = vcmp.lt.s32.totalorder %v91, 7
    %v160 = vsel %vm159, %v157, %v158
    %v161 = vsel %vm159, %v158, %v157
    %v162 = vsel %vm97, 1, 0
    %v163 = vsel %vm98, 1, 0
    %vm164 = vcmp.eq.s32.totalorder %v162, 1
    %vm165 = vcmp.eq.s32.totalorder %v163, 1
    %v166 = vsel %vm164, %v160, 0.0
    %v167 = vsel %vm165, %v161, 0.0
    %v168 = vadd.f32 %v155, %v166
    %v169 = vadd.f32 %v156, %v167
    %v170 = vrot.slane %v101, 7
    %v171 = vrot.slane %v102, 7
    %v172 = vsel %vm144, %v170, %v171
    %v173 = vsel %vm144, %v171, %v170
    %v174 = vsel %vm149, %v173, 0.0
    %v175 = vsel %vm150, %v172, 0.0
    %v176 = vrot.slane %v101, 1
    %v177 = vrot.slane %v102, 1
    %v178 = vsel %vm159, %v176, %v177
    %v179 = vsel %vm159, %v177, %v176
    %v180 = vsel %vm164, %v178, 0.0
    %v181 = vsel %vm165, %v179, 0.0
    %v182 = vsub.f32 %v174, %v180
    %v183 = vsub.f32 %v175, %v181
    %184 = vrot.lane.b32.xlu0 %v182, 16
    %v185 = vpop.permute.xlu0 %184
    %v186 = vsel %vm105, %v185, %v182
    %187 = vrot.lane.b32.xlu0 %v183, 16
    %v188 = vpop.permute.xlu0 %187
    %v189 = vsel %vm105, %v188, %v183
    %190 = vrot.lane.b32.xlu0 %v186, 16
    %v191 = vpop.permute.xlu0 %190
    %192 = vrot.lane.b32.xlu0 %v189, 16
    %v193 = vpop.permute.xlu0 %192
    %v194 = vsel %vm105, %v191, %v182
    %v195 = vsel %vm105, %v193, %v183
    %198 = vrot.lane.b32.xlu0 %v194, 113
    %v199 = vpop.permute.xlu0 %198
    %200 = vrot.lane.b32.xlu0 %v195, 113
    %v201 = vpop.permute.xlu0 %200
    %v204 = vsel %vm131, %v199, 0.0
    %v205 = vsel %vm131, %v201, 0.0
    %v206 = vmul.f32 %v182, 2.0
    %v207 = vmul.f32 %v183, 2.0
    %v208 = vadd.f32 %v204, %v206
    %v209 = vadd.f32 %v205, %v207
    %210 = vrot.lane.b32.xlu0 %v194, 127
    %v211 = vpop.permute.xlu0 %210
    %212 = vrot.lane.b32.xlu0 %v195, 127
    %v213 = vpop.permute.xlu0 %212
    %v216 = vsel %vm119, %v211, 0.0
    %v217 = vsel %vm119, %v213, 0.0
    %v218 = vadd.f32 %v208, %v216
    %v219 = vadd.f32 %v209, %v217
    %v220 = vand.u32 2147483647, %v168
    %v221 = vand.u32 2147483647, %v169
    %v222 = vand.u32 2147483647, %v218
    %v223 = vand.u32 2147483647, %v219
    %v224 = vadd.f32 %v220, %v222
    %v225 = vadd.f32 %v221, %v223
    %226 = vrot.lane.b32.xlu0 %v103, 16
    %v227 = vpop.permute.xlu0 %226
    %v228 = vsel %vm105, %v227, %v103
    %229 = vrot.lane.b32.xlu0 %v104, 16
    %v230 = vpop.permute.xlu0 %229
    %v231 = vsel %vm105, %v230, %v104
    %232 = vrot.lane.b32.xlu0 %v228, 16
    %v233 = vpop.permute.xlu0 %232
    %234 = vrot.lane.b32.xlu0 %v231, 16
    %v235 = vpop.permute.xlu0 %234
    %v236 = vsel %vm105, %v233, %v103
    %v237 = vsel %vm105, %v235, %v104
    %240 = vrot.lane.b32.xlu0 %v236, 127
    %v241 = vpop.permute.xlu0 %240
    %242 = vrot.lane.b32.xlu0 %v237, 127
    %v243 = vpop.permute.xlu0 %242
    %v246 = vsel %vm119, %v241, 0.0
    %v247 = vsel %vm119, %v243, 0.0
    %248 = vrot.lane.b32.xlu0 %v236, 113
    %v249 = vpop.permute.xlu0 %248
    %250 = vrot.lane.b32.xlu0 %v237, 113
    %v251 = vpop.permute.xlu0 %250
    %v254 = vsel %vm131, %v249, 0.0
    %v255 = vsel %vm131, %v251, 0.0
    %v256 = vsub.f32 %v246, %v254
    %v257 = vsub.f32 %v247, %v255
    %v258 = vrot.slane %v256, 7
    %v259 = vrot.slane %v257, 7
    %v260 = vsel %vm144, %v258, %v259
    %v261 = vsel %vm144, %v259, %v258
    %v262 = vsel %vm149, %v261, 0.0
    %v263 = vsel %vm150, %v260, 0.0
    %v264 = vmul.f32 %v256, 2.0
    %v265 = vmul.f32 %v257, 2.0
    %v266 = vadd.f32 %v262, %v264
    %v267 = vadd.f32 %v263, %v265
    %v268 = vrot.slane %v256, 1
    %v269 = vrot.slane %v257, 1
    %v270 = vsel %vm159, %v268, %v269
    %v271 = vsel %vm159, %v269, %v268
    %v272 = vsel %vm164, %v270, 0.0
    %v273 = vsel %vm165, %v271, 0.0
    %v274 = vadd.f32 %v266, %v272
    %v275 = vadd.f32 %v267, %v273
    %v276 = vrot.slane %v103, 7
    %v277 = vrot.slane %v104, 7
    %v278 = vsel %vm144, %v276, %v277
    %v279 = vsel %vm144, %v277, %v276
    %v280 = vsel %vm149, %v279, 0.0
    %v281 = vsel %vm150, %v278, 0.0
    %v282 = vrot.slane %v103, 1
    %v283 = vrot.slane %v104, 1
    %v284 = vsel %vm159, %v282, %v283
    %v285 = vsel %vm159, %v283, %v282
    %v286 = vsel %vm164, %v284, 0.0
    %v287 = vsel %vm165, %v285, 0.0
    %v288 = vsub.f32 %v280, %v286
    %v289 = vsub.f32 %v281, %v287
    %290 = vrot.lane.b32.xlu0 %v288, 16
    %v291 = vpop.permute.xlu0 %290
    %v292 = vsel %vm105, %v291, %v288
    %293 = vrot.lane.b32.xlu0 %v289, 16
    %v294 = vpop.permute.xlu0 %293
    %v295 = vsel %vm105, %v294, %v289
    %296 = vrot.lane.b32.xlu0 %v292, 16
    %v297 = vpop.permute.xlu0 %296
    %298 = vrot.lane.b32.xlu0 %v295, 16
    %v299 = vpop.permute.xlu0 %298
    %v300 = vsel %vm105, %v297, %v288
    %v301 = vsel %vm105, %v299, %v289
    %304 = vrot.lane.b32.xlu0 %v300, 113
    %v305 = vpop.permute.xlu0 %304
    %306 = vrot.lane.b32.xlu0 %v301, 113
    %v307 = vpop.permute.xlu0 %306
    %v310 = vsel %vm131, %v305, 0.0
    %v311 = vsel %vm131, %v307, 0.0
    %v312 = vmul.f32 %v288, 2.0
    %v313 = vmul.f32 %v289, 2.0
    %v314 = vadd.f32 %v310, %v312
    %v315 = vadd.f32 %v311, %v313
    %316 = vrot.lane.b32.xlu0 %v300, 127
    %v317 = vpop.permute.xlu0 %316
    %318 = vrot.lane.b32.xlu0 %v301, 127
    %v319 = vpop.permute.xlu0 %318
    %v322 = vsel %vm119, %v317, 0.0
    %v323 = vsel %vm119, %v319, 0.0
    %v324 = vadd.f32 %v314, %v322
    %v325 = vadd.f32 %v315, %v323
    %v326 = vand.u32 2147483647, %v274
    %v327 = vand.u32 2147483647, %v275
    %v328 = vand.u32 2147483647, %v324
    %v329 = vand.u32 2147483647, %v325
    %v330 = vadd.f32 %v326, %v328
    %v331 = vadd.f32 %v327, %v329
    %v332 = vsub.f32 %v224, %v330
    %v333 = vsub.f32 %v225, %v331
    %v334 = vand.u32 2147483647, %v332
    %v335 = vand.u32 2147483647, %v333
    %vm336 = vcmask 130048
    %v337 = vsel %vm336, %v334, 0.0
    %v338 = vsel %vm336, %v335, 0.0
    %v339 = vadd.f32 %v337, %v338
    %v340 = vrot.slane %v339, 4
    %v341 = vadd.f32 %v339, %v340
    %v342 = vrot.slane %v341, 2
    %v343 = vadd.f32 %v341, %v342
    %v344 = vrot.slane %v343, 1
    %v345 = vadd.f32 %v343, %v344
    %v346 = vadd.f32 %v345, 0.0
    %s347 = scalar_lea.vmem [#allocation2], 16
    %v348 = vld [vmem:[%s347] sm:$0xff]
    %v349 = vld [vmem:[%s347 + $0x8] sm:$0xff]
    %s350 = scalar_lea.vmem [#allocation5], 16
    %v351 = vld [vmem:[%s350] sm:$0xff]
    %v352 = vld [vmem:[%s350 + $0x8] sm:$0xff]
    %353 = vrot.lane.b32.xlu0 %v348, 16
    %v354 = vpop.permute.xlu0 %353
    %v355 = vsel %vm105, %v354, %v348
    %356 = vrot.lane.b32.xlu0 %v349, 16
    %v357 = vpop.permute.xlu0 %356
    %v358 = vsel %vm105, %v357, %v349
    %359 = vrot.lane.b32.xlu0 %v355, 16
    %v360 = vpop.permute.xlu0 %359
    %361 = vrot.lane.b32.xlu0 %v358, 16
    %v362 = vpop.permute.xlu0 %361
    %v363 = vsel %vm105, %v360, %v348
    %v364 = vsel %vm105, %v362, %v349
    %367 = vrot.lane.b32.xlu0 %v363, 127
    %v368 = vpop.permute.xlu0 %367
    %369 = vrot.lane.b32.xlu0 %v364, 127
    %v370 = vpop.permute.xlu0 %369
    %v373 = vsel %vm119, %v368, 0.0
    %v374 = vsel %vm119, %v370, 0.0
    %375 = vrot.lane.b32.xlu0 %v363, 113
    %v376 = vpop.permute.xlu0 %375
    %377 = vrot.lane.b32.xlu0 %v364, 113
    %v378 = vpop.permute.xlu0 %377
    %v381 = vsel %vm131, %v376, 0.0
    %v382 = vsel %vm131, %v378, 0.0
    %v383 = vsub.f32 %v373, %v381
    %v384 = vsub.f32 %v374, %v382
    %v385 = vrot.slane %v383, 7
    %v386 = vrot.slane %v384, 7
    %v387 = vsel %vm144, %v385, %v386
    %v388 = vsel %vm144, %v386, %v385
    %v389 = vsel %vm149, %v388, 0.0
    %v390 = vsel %vm150, %v387, 0.0
    %v391 = vmul.f32 %v383, 2.0
    %v392 = vmul.f32 %v384, 2.0
    %v393 = vadd.f32 %v389, %v391
    %v394 = vadd.f32 %v390, %v392
    %v395 = vrot.slane %v383, 1
    %v396 = vrot.slane %v384, 1
    %v397 = vsel %vm159, %v395, %v396
    %v398 = vsel %vm159, %v396, %v395
    %v399 = vsel %vm164, %v397, 0.0
    %v400 = vsel %vm165, %v398, 0.0
    %v401 = vadd.f32 %v393, %v399
    %v402 = vadd.f32 %v394, %v400
    %v403 = vrot.slane %v348, 7
    %v404 = vrot.slane %v349, 7
    %v405 = vsel %vm144, %v403, %v404
    %v406 = vsel %vm144, %v404, %v403
    %v407 = vsel %vm149, %v406, 0.0
    %v408 = vsel %vm150, %v405, 0.0
    %v409 = vrot.slane %v348, 1
    %v410 = vrot.slane %v349, 1
    %v411 = vsel %vm159, %v409, %v410
    %v412 = vsel %vm159, %v410, %v409
    %v413 = vsel %vm164, %v411, 0.0
    %v414 = vsel %vm165, %v412, 0.0
    %v415 = vsub.f32 %v407, %v413
    %v416 = vsub.f32 %v408, %v414
    %417 = vrot.lane.b32.xlu0 %v415, 16
    %v418 = vpop.permute.xlu0 %417
    %v419 = vsel %vm105, %v418, %v415
    %420 = vrot.lane.b32.xlu0 %v416, 16
    %v421 = vpop.permute.xlu0 %420
    %v422 = vsel %vm105, %v421, %v416
    %423 = vrot.lane.b32.xlu0 %v419, 16
    %v424 = vpop.permute.xlu0 %423
    %425 = vrot.lane.b32.xlu0 %v422, 16
    %v426 = vpop.permute.xlu0 %425
    %v427 = vsel %vm105, %v424, %v415
    %v428 = vsel %vm105, %v426, %v416
    %431 = vrot.lane.b32.xlu0 %v427, 113
    %v432 = vpop.permute.xlu0 %431
    %433 = vrot.lane.b32.xlu0 %v428, 113
    %v434 = vpop.permute.xlu0 %433
    %v437 = vsel %vm131, %v432, 0.0
    %v438 = vsel %vm131, %v434, 0.0
    %v439 = vmul.f32 %v415, 2.0
    %v440 = vmul.f32 %v416, 2.0
    %v441 = vadd.f32 %v437, %v439
    %v442 = vadd.f32 %v438, %v440
    %443 = vrot.lane.b32.xlu0 %v427, 127
    %v444 = vpop.permute.xlu0 %443
    %445 = vrot.lane.b32.xlu0 %v428, 127
    %v446 = vpop.permute.xlu0 %445
    %v449 = vsel %vm119, %v444, 0.0
    %v450 = vsel %vm119, %v446, 0.0
    %v451 = vadd.f32 %v441, %v449
    %v452 = vadd.f32 %v442, %v450
    %v453 = vand.u32 2147483647, %v401
    %v454 = vand.u32 2147483647, %v402
    %v455 = vand.u32 2147483647, %v451
    %v456 = vand.u32 2147483647, %v452
    %v457 = vadd.f32 %v453, %v455
    %v458 = vadd.f32 %v454, %v456
    %459 = vrot.lane.b32.xlu0 %v351, 16
    %v460 = vpop.permute.xlu0 %459
    %v461 = vsel %vm105, %v460, %v351
    %462 = vrot.lane.b32.xlu0 %v352, 16
    %v463 = vpop.permute.xlu0 %462
    %v464 = vsel %vm105, %v463, %v352
    %465 = vrot.lane.b32.xlu0 %v461, 16
    %v466 = vpop.permute.xlu0 %465
    %467 = vrot.lane.b32.xlu0 %v464, 16
    %v468 = vpop.permute.xlu0 %467
    %v469 = vsel %vm105, %v466, %v351
    %v470 = vsel %vm105, %v468, %v352
    %473 = vrot.lane.b32.xlu0 %v469, 127
    %v474 = vpop.permute.xlu0 %473
    %475 = vrot.lane.b32.xlu0 %v470, 127
    %v476 = vpop.permute.xlu0 %475
    %v479 = vsel %vm119, %v474, 0.0
    %v480 = vsel %vm119, %v476, 0.0
    %481 = vrot.lane.b32.xlu0 %v469, 113
    %v482 = vpop.permute.xlu0 %481
    %483 = vrot.lane.b32.xlu0 %v470, 113
    %v484 = vpop.permute.xlu0 %483
    %v487 = vsel %vm131, %v482, 0.0
    %v488 = vsel %vm131, %v484, 0.0
    %v489 = vsub.f32 %v479, %v487
    %v490 = vsub.f32 %v480, %v488
    %v491 = vrot.slane %v489, 7
    %v492 = vrot.slane %v490, 7
    %v493 = vsel %vm144, %v491, %v492
    %v494 = vsel %vm144, %v492, %v491
    %v495 = vsel %vm149, %v494, 0.0
    %v496 = vsel %vm150, %v493, 0.0
    %v497 = vmul.f32 %v489, 2.0
    %v498 = vmul.f32 %v490, 2.0
    %v499 = vadd.f32 %v495, %v497
    %v500 = vadd.f32 %v496, %v498
    %v501 = vrot.slane %v489, 1
    %v502 = vrot.slane %v490, 1
    %v503 = vsel %vm159, %v501, %v502
    %v504 = vsel %vm159, %v502, %v501
    %v505 = vsel %vm164, %v503, 0.0
    %v506 = vsel %vm165, %v504, 0.0
    %v507 = vadd.f32 %v499, %v505
    %v508 = vadd.f32 %v500, %v506
    %v509 = vrot.slane %v351, 7
    %v510 = vrot.slane %v352, 7
    %v511 = vsel %vm144, %v509, %v510
    %v512 = vsel %vm144, %v510, %v509
    %v513 = vsel %vm149, %v512, 0.0
    %v514 = vsel %vm150, %v511, 0.0
    %v515 = vrot.slane %v351, 1
    %v516 = vrot.slane %v352, 1
    %v517 = vsel %vm159, %v515, %v516
    %v518 = vsel %vm159, %v516, %v515
    %v519 = vsel %vm164, %v517, 0.0
    %v520 = vsel %vm165, %v518, 0.0
    %v521 = vsub.f32 %v513, %v519
    %v522 = vsub.f32 %v514, %v520
    %523 = vrot.lane.b32.xlu0 %v521, 16
    %v524 = vpop.permute.xlu0 %523
    %v525 = vsel %vm105, %v524, %v521
    %526 = vrot.lane.b32.xlu0 %v522, 16
    %v527 = vpop.permute.xlu0 %526
    %v528 = vsel %vm105, %v527, %v522
    %529 = vrot.lane.b32.xlu0 %v525, 16
    %v530 = vpop.permute.xlu0 %529
    %531 = vrot.lane.b32.xlu0 %v528, 16
    %v532 = vpop.permute.xlu0 %531
    %v533 = vsel %vm105, %v530, %v521
    %v534 = vsel %vm105, %v532, %v522
    %537 = vrot.lane.b32.xlu0 %v533, 113
    %v538 = vpop.permute.xlu0 %537
    %539 = vrot.lane.b32.xlu0 %v534, 113
    %v540 = vpop.permute.xlu0 %539
    %v543 = vsel %vm131, %v538, 0.0
    %v544 = vsel %vm131, %v540, 0.0
    %v545 = vmul.f32 %v521, 2.0
    %v546 = vmul.f32 %v522, 2.0
    %v547 = vadd.f32 %v543, %v545
    %v548 = vadd.f32 %v544, %v546
    %549 = vrot.lane.b32.xlu0 %v533, 127
    %v550 = vpop.permute.xlu0 %549
    %551 = vrot.lane.b32.xlu0 %v534, 127
    %v552 = vpop.permute.xlu0 %551
    %v555 = vsel %vm119, %v550, 0.0
    %v556 = vsel %vm119, %v552, 0.0
    %v557 = vadd.f32 %v547, %v555
    %v558 = vadd.f32 %v548, %v556
    %v559 = vand.u32 2147483647, %v507
    %v560 = vand.u32 2147483647, %v508
    %v561 = vand.u32 2147483647, %v557
    %v562 = vand.u32 2147483647, %v558
    %v563 = vadd.f32 %v559, %v561
    %v564 = vadd.f32 %v560, %v562
    %v565 = vsub.f32 %v457, %v563
    %v566 = vsub.f32 %v458, %v564
    %v567 = vand.u32 2147483647, %v565
    %v568 = vand.u32 2147483647, %v566
    %v569 = vsel %vm336, %v567, 0.0
    %v570 = vsel %vm336, %v568, 0.0
    %v571 = vadd.f32 %v569, %v570
    %v572 = vrot.slane %v571, 4
    %v573 = vadd.f32 %v571, %v572
    %v574 = vrot.slane %v573, 2
    %v575 = vadd.f32 %v573, %v574
    %v576 = vrot.slane %v575, 1
    %v577 = vadd.f32 %v575, %v576
    %v578 = vadd.f32 %v346, %v577
    %vm579 = vcmask 122880
    %580 = vst.msk [vmem:[#allocation7] sm:$0x1] %vm579, %v578
    // Predicated region
    $region18: #{tpu_custom_call.1} parent=1 // pred_check
      _
    $region19: #{tpu_custom_call.1} parent=1 // pred_check_branch
      %582 = sbr.rel (0) target = $region21
    $region20: #{tpu_custom_call.1} parent=1 // pred_region
      %s584 = ssub.s32 16, 16
      %585 = vsyncadd [#allocation4], %s584
      %s587 = sshll.u32 [#allocation7], 4
      %s588 = int_to_ptr.vmem [resolvable:$true] %s587
      %590 = dma.vmem_to_hbm [thread:$0]  %s588, 16, %s2, [#allocation4]
    $region21: #{tpu_custom_call.1} parent=1 // pred_fallthru
      _
    // Predicated region
    $region22: #{tpu_custom_call.1} parent=1 // pred_check
      _
    $region23: #{tpu_custom_call.1} parent=1 // pred_check_branch
      %592 = sbr.rel (0) target = $region25
    $region24: #{tpu_custom_call.1} parent=1 // pred_region
      %593 = dma.done [#allocation4], 16
    $region25: #{tpu_custom_call.1} parent=1 // pred_fallthru
      _
    %594 = vsyncpa [#allocation3], 1
    %595 = vsyncpa [#allocation6], 1
    %596 = vsyncpa [#allocation4], 1

</llo_original>
